<compile_context>
chip_gen: v7x
topology: tpu7x:2x2x1
jax: 0.10.0
libtpu: 0.0.40
codegen_flags: <defaults>
</compile_context>

<pallas_src>
import math
import functools

import jax
import jax.numpy as jnp
from jax.experimental import pallas as pl
from jax.experimental.pallas import tpu as pltpu

_LANE = 128     # lane width (last dim)
_SUBLANE = 8    # sublane width (second-to-last dim, f32)


def _round_up(x, m):
    return ((x + m - 1) // m) * m


def _fused_mlp_kernel(x_ref, w_ref, b_ref, o_ref, *, pads):
    # x_ref: (TB, pads[0])           f32 activations for this batch tile
    # w_ref: (L, Dmax, Dmax)         bf16 zero-padded weights, layout (in, out)
    # b_ref: (L, 1, Dmax)            f32 zero-padded biases
    # o_ref: (TB, pads[-1])          f32 padded output tile
    num_layers = len(pads) - 1
    y = x_ref[...]                                      # f32
    for i in range(num_layers):                         # static unrolled loop
        din_p, dout_p = pads[i], pads[i + 1]
        w_i = w_ref[i, :din_p, :dout_p]                 # bf16, static slice
        acc = jnp.dot(y.astype(jnp.bfloat16), w_i,
                      preferred_element_type=jnp.float32)
        y = jnp.tanh(acc + b_ref[i, :, :dout_p])        # f32 bias + tanh
    o_ref[...] = y.astype(o_ref.dtype)


def pack_params(weights, biases):
    """One-time packing of per-layer params into zero-padded stacked slabs.

    weights: list of (Din_i, Dout_i) f32 (== PyTorch weight.T per layer)
    biases:  list of (Dout_i,) f32
    Returns (w_stack bf16 (L, Dmax, Dmax), b_stack f32 (L, 1, Dmax), dims tuple).
    """
    num_layers = len(weights)
    dims = [weights[0].shape[0]] + [w.shape[1] for w in weights]
    pads = [_round_up(d, _LANE) for d in dims]
    d_max = max(pads)

    w_stack = jnp.zeros((num_layers, d_max, d_max), jnp.bfloat16)
    b_stack = jnp.zeros((num_layers, 1, d_max), jnp.float32)
    for i, (w, b) in enumerate(zip(weights, biases)):
        din_i, dout_i = w.shape
        w_stack = w_stack.at[i, :din_i, :dout_i].set(w.astype(jnp.bfloat16))
        b_stack = b_stack.at[i, 0, :dout_i].set(b.astype(jnp.float32))
    return w_stack, b_stack, tuple(dims)


def fused_mlp(x, w_stack, b_stack, dims, *, batch_tile=256):
    """Fused multi-layer tanh-MLP as a single Pallas kernel.

    x:        (B, Din) f32
    w_stack:  (L, Dmax, Dmax) bf16 padded weight slab (from pack_params)
    b_stack:  (L, 1, Dmax) f32 padded bias slab (from pack_params)
    dims:     (Din, Dout_1, ..., Dout_L) true per-layer widths
    returns:  (B, Dout_L) f32
    """
    B, Din = x.shape
    assert Din == dims[0]
    num_layers = w_stack.shape[0]
    d_max = w_stack.shape[1]
    pads = tuple(_round_up(d, _LANE) for d in dims)
    in_pad, out_pad = pads[0], pads[-1]
    out_dim = dims[-1]

    # Batch tiling: sublane-aligned; split one big tile in two when the batch
    # is large enough so a 2-TC chip (v7x) has >= 2 "parallel" tiles to shard.
    b_al = _round_up(B, _SUBLANE)
    tb = min(batch_tile, b_al)
    if b_al // tb < 2 and b_al >= 2 * _LANE:
        tb = _round_up(b_al // 2, _SUBLANE)
    b_pad = _round_up(B, tb)
    grid = (b_pad // tb,)

    # Pad activations only (params were packed once, outside the call path).
    x_pad = jnp.zeros((b_pad, in_pad), jnp.float32).at[:B, :Din].set(x)

    # VMEM budget: in/out tiles are double-buffered, params single-buffered.
    vmem_bytes = (
        2 * tb * in_pad * 4
        + 2 * tb * out_pad * 4
        + 1 * num_layers * d_max * d_max * 2      # bf16 weights, Buffered(1)
        + 1 * num_layers * d_max * 4              # f32 biases, Buffered(1)
        + 2 * tb * d_max * 4                      # activation working set
    )
    vmem_limit = min(100 * 1024 * 1024,
                     max(32 * 1024 * 1024, int(vmem_bytes * 3 // 2) + (4 << 20)))

    flops = sum(2 * b_pad * pads[i] * pads[i + 1] for i in range(num_layers))
    transcendentals = sum(b_pad * pads[i + 1] for i in range(num_layers))
    bytes_accessed = (b_pad * in_pad * 4
                      + num_layers * d_max * d_max * 2
                      + num_layers * d_max * 4
                      + b_pad * out_pad * 4)

    kernel = functools.partial(_fused_mlp_kernel, pads=pads)

    out_padded = pl.pallas_call(
        kernel,
        out_shape=jax.ShapeDtypeStruct((b_pad, out_pad), jnp.float32),
        grid=grid,
        in_specs=[
            # Activations: one batch tile per grid step (double-buffered).
            pl.BlockSpec((tb, in_pad), lambda i: (i, 0)),
            # Weights/biases: constant index_map -> VMEM-resident; single buffer.
            pl.BlockSpec((num_layers, d_max, d_max), lambda i: (0, 0, 0),
                         pipeline_mode=pl.Buffered(1)),
            pl.BlockSpec((num_layers, 1, d_max), lambda i: (0, 0, 0),
                         pipeline_mode=pl.Buffered(1)),
        ],
        out_specs=pl.BlockSpec((tb, out_pad), lambda i: (i, 0)),
        compiler_params=pltpu.CompilerParams(
            dimension_semantics=("parallel",),
            vmem_limit_bytes=vmem_limit,
        ),
        cost_estimate=pl.CostEstimate(
            flops=flops,
            transcendentals=transcendentals,
            bytes_accessed=bytes_accessed,
        ),
    )(x_pad, w_stack, b_stack)

    return out_padded[:B, :out_dim]


def init_params(key, input_size, num_layers, layer_size, output_size):
    """Deterministic init mirroring nn.Linear's U(-1/sqrt(fan_in), 1/sqrt(fan_in))."""
    dims = [input_size] + [layer_size] * (num_layers - 1) + [output_size]
    weights, biases = [], []
    for i in range(num_layers):
        fan_in, fan_out = dims[i], dims[i + 1]
        key, kw, kb = jax.random.split(key, 3)
        bound = 1.0 / math.sqrt(fan_in)
        w = jax.random.uniform(kw, (fan_in, fan_out), jnp.float32, -bound, bound)
        b = jax.random.uniform(kb, (fan_out,), jnp.float32, -bound, bound)
        weights.append(w)
        biases.append(b)
    return weights, biases


def neural_network_forward(x, w_stack, b_stack, dims):
    return fused_mlp(x, w_stack, b_stack, dims)


if __name__ == "__main__":
    # Small shapes consistent with the module's forward.
    batch = 8
    input_size = 32
    num_layers = 3
    layer_size = 64
    output_size = 16

    key = jax.random.PRNGKey(0)
    key, kx = jax.random.split(key)
    x = jax.random.normal(kx, (batch, input_size), jnp.float32)

    weights, biases = init_params(key, input_size, num_layers, layer_size,
                                  output_size)

    # One-time parameter packing (hoisted out of the per-call path).
    w_stack, b_stack, dims = pack_params(weights, biases)

    out = neural_network_forward(x, w_stack, b_stack, dims)
    out = jax.block_until_ready(out)

    # Sanity check against a plain-JAX f32 reference of the same forward pass.
    # Tolerance is loosened because matmul operands run in bf16 on the MXU.
    ref = x
    for w, b in zip(weights, biases):
        ref = jnp.tanh(ref @ w + b)
    assert out.shape == (batch, output_size)
    assert jnp.allclose(out, ref, atol=3e-2, rtol=3e-2), (
        float(jnp.max(jnp.abs(out - ref))))

    print("KERNEL_OK")
</pallas_src>

<mosaic_0001>
module attributes {stable_mosaic.version = 11 : i64} {
  func.func @_fused_mlp_kernel(%arg0: i32, %arg1: memref<8x128xf32, #tpu.memory_space<vmem>>, %arg2: memref<3x128x128xbf16, #tpu.memory_space<vmem>>, %arg3: memref<3x1x128xf32, #tpu.memory_space<vmem>>, %arg4: memref<8x128xf32, #tpu.memory_space<vmem>>) attributes {dimension_semantics = [#tpu.dimension_semantics<parallel>], iteration_bounds = array<i64: 1>, scalar_prefetch = 0 : i64, scratch_operands = 0 : i64, tpu.core_type = #tpu.core_type<tc>, window_params = [{transform_indices = @transform_0, window_bounds = array<i64: 8, 128>}, {pipeline_mode = #tpu.pipeline_mode<synchronous>, transform_indices = @transform_1, window_bounds = array<i64: 3, 128, 128>}, {pipeline_mode = #tpu.pipeline_mode<synchronous>, transform_indices = @transform_2, window_bounds = array<i64: 3, 1, 128>}, {transform_indices = @transform_3, window_bounds = array<i64: 8, 128>}]} {
    %c0 = arith.constant 0 : index
    %c0_0 = arith.constant 0 : index
    %0 = vector.load %arg1[%c0, %c0_0] : memref<8x128xf32, #tpu.memory_space<vmem>>, vector<8x128xf32>
    %c0_1 = arith.constant 0 : index
    %c0_2 = arith.constant 0 : index
    %c0_3 = arith.constant 0 : index
    %1 = vector.load %arg2[%c0_1, %c0_2, %c0_3] : memref<3x128x128xbf16, #tpu.memory_space<vmem>>, vector<1x128x128xbf16>
    %2 = vector.shape_cast %1 : vector<1x128x128xbf16> to vector<128x128xbf16>
    %3 = arith.truncf %0 : vector<8x128xf32> to vector<8x128xbf16>
    %cst = arith.constant dense<0.000000e+00> : vector<8x128xf32>
    %4 = tpu.matmul %3, %2, %cst {dimension_numbers = #tpu.dot_dimension_numbers<[1], [0], [0], [1], [0, 0, 1, 1], [], []>} : vector<8x128xbf16>, vector<128x128xbf16>, vector<8x128xf32> -> vector<8x128xf32>
    %c0_4 = arith.constant 0 : index
    %c0_5 = arith.constant 0 : index
    %c0_6 = arith.constant 0 : index
    %5 = vector.load %arg3[%c0_4, %c0_5, %c0_6] : memref<3x1x128xf32, #tpu.memory_space<vmem>>, vector<1x1x128xf32>
    %6 = vector.shape_cast %5 : vector<1x1x128xf32> to vector<1x128xf32>
    %7 = vector.broadcast %6 : vector<1x128xf32> to vector<8x128xf32>
    %8 = arith.addf %4, %7 : vector<8x128xf32>
    %9 = math.tanh %8 : vector<8x128xf32>
    %c1 = arith.constant 1 : index
    %c0_7 = arith.constant 0 : index
    %c0_8 = arith.constant 0 : index
    %10 = vector.load %arg2[%c1, %c0_7, %c0_8] : memref<3x128x128xbf16, #tpu.memory_space<vmem>>, vector<1x128x128xbf16>
    %11 = vector.shape_cast %10 : vector<1x128x128xbf16> to vector<128x128xbf16>
    %12 = arith.truncf %9 : vector<8x128xf32> to vector<8x128xbf16>
    %cst_9 = arith.constant dense<0.000000e+00> : vector<8x128xf32>
    %13 = tpu.matmul %12, %11, %cst_9 {dimension_numbers = #tpu.dot_dimension_numbers<[1], [0], [0], [1], [0, 0, 1, 1], [], []>} : vector<8x128xbf16>, vector<128x128xbf16>, vector<8x128xf32> -> vector<8x128xf32>
    %c1_10 = arith.constant 1 : index
    %c0_11 = arith.constant 0 : index
    %c0_12 = arith.constant 0 : index
    %14 = vector.load %arg3[%c1_10, %c0_11, %c0_12] : memref<3x1x128xf32, #tpu.memory_space<vmem>>, vector<1x1x128xf32>
    %15 = vector.shape_cast %14 : vector<1x1x128xf32> to vector<1x128xf32>
    %16 = vector.broadcast %15 : vector<1x128xf32> to vector<8x128xf32>
    %17 = arith.addf %13, %16 : vector<8x128xf32>
    %18 = math.tanh %17 : vector<8x128xf32>
    %c2 = arith.constant 2 : index
    %c0_13 = arith.constant 0 : index
    %c0_14 = arith.constant 0 : index
    %19 = vector.load %arg2[%c2, %c0_13, %c0_14] : memref<3x128x128xbf16, #tpu.memory_space<vmem>>, vector<1x128x128xbf16>
    %20 = vector.shape_cast %19 : vector<1x128x128xbf16> to vector<128x128xbf16>
    %21 = arith.truncf %18 : vector<8x128xf32> to vector<8x128xbf16>
    %cst_15 = arith.constant dense<0.000000e+00> : vector<8x128xf32>
    %22 = tpu.matmul %21, %20, %cst_15 {dimension_numbers = #tpu.dot_dimension_numbers<[1], [0], [0], [1], [0, 0, 1, 1], [], []>} : vector<8x128xbf16>, vector<128x128xbf16>, vector<8x128xf32> -> vector<8x128xf32>
    %c2_16 = arith.constant 2 : index
    %c0_17 = arith.constant 0 : index
    %c0_18 = arith.constant 0 : index
    %23 = vector.load %arg3[%c2_16, %c0_17, %c0_18] : memref<3x1x128xf32, #tpu.memory_space<vmem>>, vector<1x1x128xf32>
    %24 = vector.shape_cast %23 : vector<1x1x128xf32> to vector<1x128xf32>
    %25 = vector.broadcast %24 : vector<1x128xf32> to vector<8x128xf32>
    %26 = arith.addf %22, %25 : vector<8x128xf32>
    %27 = math.tanh %26 : vector<8x128xf32>
    %c0_19 = arith.constant 0 : index
    %c0_20 = arith.constant 0 : index
    %28 = vector.load %arg4[%c0_19, %c0_20] : memref<8x128xf32, #tpu.memory_space<vmem>>, vector<8x128xf32>
    tpu.vector_store %arg4[%c0_19, %c0_20], %27 {strides = array<i32>} : memref<8x128xf32, #tpu.memory_space<vmem>>, vector<8x128xf32>,
    return
  }
  func.func @transform_0(%arg0: i32) -> (i32, i32) {
    %c0_i32 = arith.constant 0 : i32
    %c0_i32_0 = arith.constant 0 : i32
    return %arg0, %c0_i32 : i32, i32
  }
  func.func @transform_1(%arg0: i32) -> (i32, i32, i32) {
    %c0_i32 = arith.constant 0 : i32
    %c0_i32_0 = arith.constant 0 : i32
    %c0_i32_1 = arith.constant 0 : i32
    %c0_i32_2 = arith.constant 0 : i32
    return %c0_i32, %c0_i32_0, %c0_i32_1 : i32, i32, i32
  }
  func.func @transform_2(%arg0: i32) -> (i32, i32, i32) {
    %c0_i32 = arith.constant 0 : i32
    %c0_i32_0 = arith.constant 0 : i32
    %c0_i32_1 = arith.constant 0 : i32
    %c0_i32_2 = arith.constant 0 : i32
    return %c0_i32, %c0_i32_0, %c0_i32_1 : i32, i32, i32
  }
  func.func @transform_3(%arg0: i32) -> (i32, i32) {
    %c0_i32 = arith.constant 0 : i32
    %c0_i32_0 = arith.constant 0 : i32
    return %arg0, %c0_i32 : i32, i32
  }
}

</mosaic_0001>

<llo_original>
// kernel: tpu_custom_call.1
$region0: #{tpu_custom_call.1}
  #allocation0 [shape = 'u32[]', space=smem, size = 0x4, offset = 0x4, fixed_abs, tag = 'smem constant byte address 0x4 - core index']
  #allocation1 [shape = 'u32[144,128]{1,0:T(1,128)}', space=vmem, size = 0x12000, scoped, tag = 'internal scratch']
  %s0 = inlined_call_operand.hbm [shape: f32[8,128], index: 0, kind: input, shape index: {}]
  %s1 = inlined_call_operand.hbm [shape: bf16[3,128,128], index: 1, kind: input, shape index: {}]
  %s2 = inlined_call_operand.vmem [shape: f32[3,1,128], index: 2, kind: input, shape index: {}]
  %s3 = inlined_call_operand.hbm [shape: f32[8,128], index: 3, kind: output, shape index: {}]
  %s4 = sld [smem:[#allocation0]]
  $region30: #{tpu_custom_call.1} parent=0
    _
  %s6 = ssub.s32 1, %s4
  %s7 = scalar_select 0, %s6, %s4
  $region1: #{tpu_custom_call.1} parent=0
    #allocation2 [shape = 'u8[4096]{0}', space=vmem, size = 0x1000, scoped, tag = 'input window, operand 0, single buffered']
    #allocation3 [shape = 's32[1]{0}', space=sflag, size = 0x4, scoped, tag = 'scoped memory for tpu_custom_call.1']
    #allocation4 [shape = 's32[1]{0}', space=sflag, size = 0x4, scoped, tag = 'scoped memory for tpu_custom_call.1']
    #allocation5 [shape = 'u8[98304]{0}', space=vmem, size = 0x18000, scoped, tag = 'input window, operand 1, single buffered']
    #allocation6 [shape = 's32[1]{0}', space=sflag, size = 0x4, scoped, tag = 'scoped memory for tpu_custom_call.1']
    #allocation7 [shape = 'u8[4096]{0}', space=vmem, size = 0x1000, scoped, tag = 'output window, operand 0, single buffered']
    %8 = vsyncpa [#allocation3], 0
    %9 = vsyncpa [#allocation6], 0
    %10 = vsyncpa [#allocation4], 0
    // Predicated region
    $region2: #{tpu_custom_call.1} parent=1 // pred_check
      _
    $region3: #{tpu_custom_call.1} parent=1 // pred_check_branch
      %12 = sbr.rel (0) target = $region5
    $region4: #{tpu_custom_call.1} parent=1 // pred_region
      %s14 = ssub.s32 128, 128
      %15 = vsyncadd [#allocation3], %s14
      %s17 = sshll.u32 [#allocation2], 4
      %s18 = int_to_ptr.vmem [resolvable:$true] %s17
      %20 = dma.hbm_to_vmem [thread:$0]  %s0, 128, %s18, [#allocation3]
    $region5: #{tpu_custom_call.1} parent=1 // pred_fallthru
      _
    // Predicated region
    $region6: #{tpu_custom_call.1} parent=1 // pred_check
      _
    $region7: #{tpu_custom_call.1} parent=1 // pred_check_branch
      %22 = sbr.rel (0) target = $region9
    $region8: #{tpu_custom_call.1} parent=1 // pred_region
      %s24 = ssub.s32 3072, 3072
      %25 = vsyncadd [#allocation6], %s24
      %s26 = sshll.u32 [#allocation5], 4
      %s27 = int_to_ptr.vmem [resolvable:$true] %s26
      %32 = dma.hbm_to_vmem [thread:$0]  %s1, 3072, %s27, [#allocation6], 64, 64, 4
    $region9: #{tpu_custom_call.1} parent=1 // pred_fallthru
      _
    // Predicated region
    $region10: #{tpu_custom_call.1} parent=1 // pred_check
      _
    $region11: #{tpu_custom_call.1} parent=1 // pred_check_branch
      %34 = sbr.rel (0) target = $region13
    $region12: #{tpu_custom_call.1} parent=1 // pred_region
      _
    $region13: #{tpu_custom_call.1} parent=1 // pred_fallthru
      _
    // Predicated region
    $region14: #{tpu_custom_call.1} parent=1 // pred_check
      _
    $region15: #{tpu_custom_call.1} parent=1 // pred_check_branch
      %36 = sbr.rel (0) target = $region17
    $region16: #{tpu_custom_call.1} parent=1 // pred_region
      %37 = dma.done [#allocation3], 128
    $region17: #{tpu_custom_call.1} parent=1 // pred_fallthru
      _
    // Predicated region
    $region18: #{tpu_custom_call.1} parent=1 // pred_check
      _
    $region19: #{tpu_custom_call.1} parent=1 // pred_check_branch
      %39 = sbr.rel (0) target = $region21
    $region20: #{tpu_custom_call.1} parent=1 // pred_region
      %40 = dma.done [#allocation6], 3072
    $region21: #{tpu_custom_call.1} parent=1 // pred_fallthru
      _
    %v42 = vld [vmem:[#allocation2] sm:$0xff]
    %v43 = vld [vmem:[#allocation5] sm:$0xf]
    %v44 = vld [vmem:[#allocation5 + $0x4] sm:$0xf]
    %v45 = vld [vmem:[#allocation5 + $0x8] sm:$0xf]
    %v46 = vld [vmem:[#allocation5 + $0xc] sm:$0xf]
    %v47 = vld [vmem:[#allocation5 + $0x10] sm:$0xf]
    %v48 = vld [vmem:[#allocation5 + $0x14] sm:$0xf]
    %v49 = vld [vmem:[#allocation5 + $0x18] sm:$0xf]
    %v50 = vld [vmem:[#allocation5 + $0x1c] sm:$0xf]
    %v51 = vld [vmem:[#allocation5 + $0x20] sm:$0xf]
    %v52 = vld [vmem:[#allocation5 + $0x24] sm:$0xf]
    %v53 = vld [vmem:[#allocation5 + $0x28] sm:$0xf]
    %v54 = vld [vmem:[#allocation5 + $0x2c] sm:$0xf]
    %v55 = vld [vmem:[#allocation5 + $0x30] sm:$0xf]
    %v56 = vld [vmem:[#allocation5 + $0x34] sm:$0xf]
    %v57 = vld [vmem:[#allocation5 + $0x38] sm:$0xf]
    %v58 = vld [vmem:[#allocation5 + $0x3c] sm:$0xf]
    %v59 = vpack.c.bf16 %v42, %v42
    %v60 = vld [vmem:[%s2] sm:$0x1]
    %v62 = vlaneseq
    %v63 = vshrl.u32 %v62, 7
    %v64 = vsub.s32 0, %v63
    %v65 = vrot.slane %v60, %v64
    %v83 = vunpack.c.l.b16 %v43
    %v84 = vunpack.c.l.b16 %v44
    %v85 = vunpack.c.l.b16 %v45
    %v86 = vunpack.c.l.b16 %v46
    %v87 = vunpack.c.l.b16 %v47
    %v88 = vunpack.c.l.b16 %v48
    %v89 = vunpack.c.l.b16 %v49
    %v90 = vunpack.c.l.b16 %v50
    %v91 = vunpack.c.l.b16 %v51
    %v92 = vunpack.c.l.b16 %v52
    %v93 = vunpack.c.l.b16 %v53
    %v94 = vunpack.c.l.b16 %v54
    %v95 = vunpack.c.l.b16 %v55
    %v96 = vunpack.c.l.b16 %v56
    %v97 = vunpack.c.l.b16 %v57
    %v98 = vunpack.c.l.b16 %v58
    %v99 = vpack.c.b16 %v84, %v83
    %v100 = vpack.c.b16 %v86, %v85
    %v101 = vpack.c.b16 %v88, %v87
    %v102 = vpack.c.b16 %v90, %v89
    %v103 = vpack.c.b16 %v92, %v91
    %v104 = vpack.c.b16 %v94, %v93
    %v105 = vpack.c.b16 %v96, %v95
    %v106 = vpack.c.b16 %v98, %v97
    %115 = vmatprep.subr.bf16.mxu0 0
    %116 = vmatpush1.bf16.msra.mxu0 %v99
    %117 = vmatprep.subr.bf16.mxu0 0
    %118 = vmatpush1.bf16.msra.mxu0 %v100
    %119 = vmatprep.subr.bf16.mxu0 0
    %120 = vmatpush1.bf16.msra.mxu0 %v101
    %121 = vmatprep.subr.bf16.mxu0 0
    %122 = vmatpush1.bf16.msra.mxu0 %v102
    %123 = vmatprep.subr.bf16.mxu0 0
    %124 = vmatpush1.bf16.msra.mxu0 %v103
    %125 = vmatprep.subr.bf16.mxu0 0
    %126 = vmatpush1.bf16.msra.mxu0 %v104
    %127 = vmatprep.subr.bf16.mxu0 0
    %128 = vmatpush1.bf16.msra.mxu0 %v105
    %129 = vmatprep.subr.bf16.mxu0 0
    %130 = vmatpush1.bf16.msra.mxu0 %v106
    %131 = vmatprep.subr.bf16.mxu0 0
    %132 = vmatpush1.bf16.msra.mxu0 0
    %133 = vmatprep.subr.bf16.mxu0 0
    %134 = vmatpush1.bf16.msra.mxu0 0
    %135 = vmatprep.subr.bf16.mxu0 0
    %136 = vmatpush1.bf16.msra.mxu0 0
    %137 = vmatprep.subr.bf16.mxu0 0
    %138 = vmatpush1.bf16.msra.mxu0 0
    %139 = vmatprep.subr.bf16.mxu0 0
    %140 = vmatpush1.bf16.msra.mxu0 0
    %141 = vmatprep.subr.bf16.mxu0 0
    %142 = vmatpush1.bf16.msra.mxu0 0
    %143 = vmatprep.subr.bf16.mxu0 0
    %144 = vmatpush1.bf16.msra.mxu0 0
    %145 = vmatprep.subr.bf16.mxu0 0
    %146 = vmatpush1.bf16.msra.mxu0 0
    %147 = vmatprep.mubr.bf16.mxu0 0
    %148 = vmatmul.mubr.bf16.gmra.mrb[0].mxu0 %v59
    %v149 = vpop.f32.mrb[0].mxu0
    %v150 = vadd.f32 %v65, %v149
    %v151 = vpop.f32.mrb[0].mxu0
    %v152 = vpop.f32.mrb[0].mxu0
    %v153 = vpop.f32.mrb[0].mxu0
    %154 = vdwg.mxu0
    %v155 = vtanh.pop %v150
    %s156 = scalar_lea.vmem [#allocation5], 64
    %v157 = vld [vmem:[%s156] sm:$0xf]
    %v158 = vld [vmem:[%s156 + $0x4] sm:$0xf]
    %v159 = vld [vmem:[%s156 + $0x8] sm:$0xf]
    %v160 = vld [vmem:[%s156 + $0xc] sm:$0xf]
    %v161 = vld [vmem:[%s156 + $0x10] sm:$0xf]
    %v162 = vld [vmem:[%s156 + $0x14] sm:$0xf]
    %v163 = vld [vmem:[%s156 + $0x18] sm:$0xf]
    %v164 = vld [vmem:[%s156 + $0x1c] sm:$0xf]
    %v165 = vld [vmem:[%s156 + $0x20] sm:$0xf]
    %v166 = vld [vmem:[%s156 + $0x24] sm:$0xf]
    %v167 = vld [vmem:[%s156 + $0x28] sm:$0xf]
    %v168 = vld [vmem:[%s156 + $0x2c] sm:$0xf]
    %v169 = vld [vmem:[%s156 + $0x30] sm:$0xf]
    %v170 = vld [vmem:[%s156 + $0x34] sm:$0xf]
    %v171 = vld [vmem:[%s156 + $0x38] sm:$0xf]
    %v172 = vld [vmem:[%s156 + $0x3c] sm:$0xf]
    %v173 = vpack.c.bf16 %v155, %v155
    %s174 = scalar_lea.vmem %s2, 1
    %v175 = vld [vmem:[%s174] sm:$0x1]
    %v177 = vlaneseq
    %v178 = vshrl.u32 %v177, 7
    %v179 = vsub.s32 0, %v178
    %v180 = vrot.slane %v175, %v179
    %v198 = vunpack.c.l.b16 %v157
    %v199 = vunpack.c.l.b16 %v158
    %v200 = vunpack.c.l.b16 %v159
    %v201 = vunpack.c.l.b16 %v160
    %v202 = vunpack.c.l.b16 %v161
    %v203 = vunpack.c.l.b16 %v162
    %v204 = vunpack.c.l.b16 %v163
    %v205 = vunpack.c.l.b16 %v164
    %v206 = vunpack.c.l.b16 %v165
    %v207 = vunpack.c.l.b16 %v166
    %v208 = vunpack.c.l.b16 %v167
    %v209 = vunpack.c.l.b16 %v168
    %v210 = vunpack.c.l.b16 %v169
    %v211 = vunpack.c.l.b16 %v170
    %v212 = vunpack.c.l.b16 %v171
    %v213 = vunpack.c.l.b16 %v172
    %v214 = vpack.c.b16 %v199, %v198
    %v215 = vpack.c.b16 %v201, %v200
    %v216 = vpack.c.b16 %v203, %v202
    %v217 = vpack.c.b16 %v205, %v204
    %v218 = vpack.c.b16 %v207, %v206
    %v219 = vpack.c.b16 %v209, %v208
    %v220 = vpack.c.b16 %v211, %v210
    %v221 = vpack.c.b16 %v213, %v212
    %230 = vmatprep.subr.bf16.mxu0 0
    %231 = vmatpush1.bf16.msra.mxu0 %v214
    %232 = vmatprep.subr.bf16.mxu0 0
    %233 = vmatpush1.bf16.msra.mxu0 %v215
    %234 = vmatprep.subr.bf16.mxu0 0
    %235 = vmatpush1.bf16.msra.mxu0 %v216
    %236 = vmatprep.subr.bf16.mxu0 0
    %237 = vmatpush1.bf16.msra.mxu0 %v217
    %238 = vmatprep.subr.bf16.mxu0 0
    %239 = vmatpush1.bf16.msra.mxu0 %v218
    %240 = vmatprep.subr.bf16.mxu0 0
    %241 = vmatpush1.bf16.msra.mxu0 %v219
    %242 = vmatprep.subr.bf16.mxu0 0
    %243 = vmatpush1.bf16.msra.mxu0 %v220
    %244 = vmatprep.subr.bf16.mxu0 0
    %245 = vmatpush1.bf16.msra.mxu0 %v221
    %246 = vmatprep.subr.bf16.mxu0 0
    %247 = vmatpush1.bf16.msra.mxu0 0
    %248 = vmatprep.subr.bf16.mxu0 0
    %249 = vmatpush1.bf16.msra.mxu0 0
    %250 = vmatprep.subr.bf16.mxu0 0
    %251 = vmatpush1.bf16.msra.mxu0 0
    %252 = vmatprep.subr.bf16.mxu0 0
    %253 = vmatpush1.bf16.msra.mxu0 0
    %254 = vmatprep.subr.bf16.mxu0 0
    %255 = vmatpush1.bf16.msra.mxu0 0
    %256 = vmatprep.subr.bf16.mxu0 0
    %257 = vmatpush1.bf16.msra.mxu0 0
    %258 = vmatprep.subr.bf16.mxu0 0
    %259 = vmatpush1.bf16.msra.mxu0 0
    %260 = vmatprep.subr.bf16.mxu0 0
    %261 = vmatpush1.bf16.msra.mxu0 0
    %262 = vmatprep.mubr.bf16.mxu0 0
    %263 = vmatmul.mubr.bf16.gmra.mrb[0].mxu0 %v173
    %v264 = vpop.f32.mrb[0].mxu0
    %v265 = vadd.f32 %v180, %v264
    %v266 = vpop.f32.mrb[0].mxu0
    %v267 = vpop.f32.mrb[0].mxu0
    %v268 = vpop.f32.mrb[0].mxu0
    %269 = vdwg.mxu0
    %v270 = vtanh.pop %v265
    %s271 = scalar_lea.vmem [#allocation5], 128
    %v272 = vld [vmem:[%s271] sm:$0xf]
    %v273 = vld [vmem:[%s271 + $0x4] sm:$0xf]
    %v274 = vld [vmem:[%s271 + $0x8] sm:$0xf]
    %v275 = vld [vmem:[%s271 + $0xc] sm:$0xf]
    %v276 = vld [vmem:[%s271 + $0x10] sm:$0xf]
    %v277 = vld [vmem:[%s271 + $0x14] sm:$0xf]
    %v278 = vld [vmem:[%s271 + $0x18] sm:$0xf]
    %v279 = vld [vmem:[%s271 + $0x1c] sm:$0xf]
    %v280 = vld [vmem:[%s271 + $0x20] sm:$0xf]
    %v281 = vld [vmem:[%s271 + $0x24] sm:$0xf]
    %v282 = vld [vmem:[%s271 + $0x28] sm:$0xf]
    %v283 = vld [vmem:[%s271 + $0x2c] sm:$0xf]
    %v284 = vld [vmem:[%s271 + $0x30] sm:$0xf]
    %v285 = vld [vmem:[%s271 + $0x34] sm:$0xf]
    %v286 = vld [vmem:[%s271 + $0x38] sm:$0xf]
    %v287 = vld [vmem:[%s271 + $0x3c] sm:$0xf]
    %v288 = vpack.c.bf16 %v270, %v270
    %s289 = scalar_lea.vmem %s2, 2
    %v290 = vld [vmem:[%s289] sm:$0x1]
    %v292 = vlaneseq
    %v293 = vshrl.u32 %v292, 7
    %v294 = vsub.s32 0, %v293
    %v295 = vrot.slane %v290, %v294
    %v313 = vunpack.c.l.b16 %v272
    %v314 = vunpack.c.l.b16 %v273
    %v315 = vunpack.c.l.b16 %v274
    %v316 = vunpack.c.l.b16 %v275
    %v317 = vunpack.c.l.b16 %v276
    %v318 = vunpack.c.l.b16 %v277
    %v319 = vunpack.c.l.b16 %v278
    %v320 = vunpack.c.l.b16 %v279
    %v321 = vunpack.c.l.b16 %v280
    %v322 = vunpack.c.l.b16 %v281
    %v323 = vunpack.c.l.b16 %v282
    %v324 = vunpack.c.l.b16 %v283
    %v325 = vunpack.c.l.b16 %v284
    %v326 = vunpack.c.l.b16 %v285
    %v327 = vunpack.c.l.b16 %v286
    %v328 = vunpack.c.l.b16 %v287
    %v329 = vpack.c.b16 %v314, %v313
    %v330 = vpack.c.b16 %v316, %v315
    %v331 = vpack.c.b16 %v318, %v317
    %v332 = vpack.c.b16 %v320, %v319
    %v333 = vpack.c.b16 %v322, %v321
    %v334 = vpack.c.b16 %v324, %v323
    %v335 = vpack.c.b16 %v326, %v325
    %v336 = vpack.c.b16 %v328, %v327
    %345 = vmatprep.subr.bf16.mxu0 0
    %346 = vmatpush1.bf16.msra.mxu0 %v329
    %347 = vmatprep.subr.bf16.mxu0 0
    %348 = vmatpush1.bf16.msra.mxu0 %v330
    %349 = vmatprep.subr.bf16.mxu0 0
    %350 = vmatpush1.bf16.msra.mxu0 %v331
    %351 = vmatprep.subr.bf16.mxu0 0
    %352 = vmatpush1.bf16.msra.mxu0 %v332
    %353 = vmatprep.subr.bf16.mxu0 0
    %354 = vmatpush1.bf16.msra.mxu0 %v333
    %355 = vmatprep.subr.bf16.mxu0 0
    %356 = vmatpush1.bf16.msra.mxu0 %v334
    %357 = vmatprep.subr.bf16.mxu0 0
    %358 = vmatpush1.bf16.msra.mxu0 %v335
    %359 = vmatprep.subr.bf16.mxu0 0
    %360 = vmatpush1.bf16.msra.mxu0 %v336
    %361 = vmatprep.subr.bf16.mxu0 0
    %362 = vmatpush1.bf16.msra.mxu0 0
    %363 = vmatprep.subr.bf16.mxu0 0
    %364 = vmatpush1.bf16.msra.mxu0 0
    %365 = vmatprep.subr.bf16.mxu0 0
    %366 = vmatpush1.bf16.msra.mxu0 0
    %367 = vmatprep.subr.bf16.mxu0 0
    %368 = vmatpush1.bf16.msra.mxu0 0
    %369 = vmatprep.subr.bf16.mxu0 0
    %370 = vmatpush1.bf16.msra.mxu0 0
    %371 = vmatprep.subr.bf16.mxu0 0
    %372 = vmatpush1.bf16.msra.mxu0 0
    %373 = vmatprep.subr.bf16.mxu0 0
    %374 = vmatpush1.bf16.msra.mxu0 0
    %375 = vmatprep.subr.bf16.mxu0 0
    %376 = vmatpush1.bf16.msra.mxu0 0
    %377 = vmatprep.mubr.bf16.mxu0 0
    %378 = vmatmul.mubr.bf16.gmra.mrb[0].mxu0 %v288
    %v379 = vpop.f32.mrb[0].mxu0
    %v380 = vadd.f32 %v295, %v379
    %v381 = vpop.f32.mrb[0].mxu0
    %v382 = vpop.f32.mrb[0].mxu0
    %v383 = vpop.f32.mrb[0].mxu0
    %384 = vdwg.mxu0
    %v385 = vtanh.pop %v380
    %386 = vst [vmem:[#allocation7] sm:$0xff] %v385
    // Predicated region
    $region22: #{tpu_custom_call.1} parent=1 // pred_check
      _
    $region23: #{tpu_custom_call.1} parent=1 // pred_check_branch
      %388 = sbr.rel (0) target = $region25
    $region24: #{tpu_custom_call.1} parent=1 // pred_region
      %s390 = ssub.s32 128, 128
      %391 = vsyncadd [#allocation4], %s390
      %s393 = sshll.u32 [#allocation7], 4
      %s394 = int_to_ptr.vmem [resolvable:$true] %s393
      %396 = dma.vmem_to_hbm [thread:$0]  %s394, 128, %s3, [#allocation4]
    $region25: #{tpu_custom_call.1} parent=1 // pred_fallthru
      _
    // Predicated region
    $region26: #{tpu_custom_call.1} parent=1 // pred_check
      _
    $region27: #{tpu_custom_call.1} parent=1 // pred_check_branch
      %398 = sbr.rel (0) target = $region29
    $region28: #{tpu_custom_call.1} parent=1 // pred_region
      %399 = dma.done [#allocation4], 128
    $region29: #{tpu_custom_call.1} parent=1 // pred_fallthru
      _
    %400 = vsyncpa [#allocation3], 1
    %401 = vsyncpa [#allocation6], 1
    %402 = vsyncpa [#allocation4], 1

</llo_original>
